<compile_context>
chip_gen: v6e
topology: v6e:2x2x1
jax: 0.10.0
libtpu: 0.0.40
codegen_flags: <defaults>
</compile_context>

<pallas_src>
import functools

import numpy as np
import jax
import jax.numpy as jnp
from jax.experimental import pallas as pl
from jax.experimental.pallas import tpu as pltpu


# ---------------------------------------------------------------------------
# Kernel
# ---------------------------------------------------------------------------
def _decoder_layer_kernel(x_ref, gamma_ref, beta_ref, wgu_ref, wd_ref,
                          o_ref, normed_ref, acc_ref, *, eps, act_name, tile_i):
    """Shapes seen by the kernel:
         x_ref      (tM, H)        activation row tile (resident across i)
         gamma_ref  (1, H)         LayerNorm weight
         beta_ref   (1, H)         LayerNorm bias
         wgu_ref    (1, H, 2*tI)   fused, pre-blocked gate|up weight chunk
         wd_ref     (tI, H)        down-proj weight chunk (contiguous rows)
         o_ref      (tM, H)        output row tile (resident across i)
         normed_ref (tM, H)        VMEM scratch: LayerNorm(x) row tile
         acc_ref    (tM, H) f32    VMEM scratch: accumulator (seeded w/ residual)
    """
    i = pl.program_id(1)
    act = getattr(jax.nn, act_name)

    # --- init: LayerNorm once per row tile, seed accumulator with residual ---
    @pl.when(i == 0)
    def _():
        x = x_ref[...].astype(jnp.float32)
        mean = jnp.mean(x, axis=-1, keepdims=True)
        xc = x - mean
        var = jnp.mean(xc * xc, axis=-1, keepdims=True)      # biased, like nn.LayerNorm
        inv = jax.lax.rsqrt(var + eps)
        g = gamma_ref[...].astype(jnp.float32)                # (1, H) broadcast
        b = beta_ref[...].astype(jnp.float32)
        normed_ref[...] = (xc * inv * g + b).astype(normed_ref.dtype)
        acc_ref[...] = x                                      # residual seeds the acc

    # --- per-chunk gated MLP contribution (one MXU pass covers gate|up) ------
    n = normed_ref[...]
    gu = jnp.dot(n, wgu_ref[0], preferred_element_type=jnp.float32)   # (tM, 2*tI)
    gate = gu[:, :tile_i]
    up = gu[:, tile_i:]
    h = (act(gate) * up).astype(wd_ref.dtype)
    acc_ref[...] += jnp.dot(h, wd_ref[...], preferred_element_type=jnp.float32)

    # --- finalize: writeback (residual already inside the accumulator) -------
    @pl.when(i == pl.num_programs(1) - 1)
    def _():
        o_ref[...] = acc_ref[...].astype(o_ref.dtype)


# ---------------------------------------------------------------------------
# Tile sizing / VMEM budgeting
# ---------------------------------------------------------------------------
def _physical_vmem_bytes():
    """Physical VMEM per TensorCore; conservative 64 MiB fallback (v7x-sized)."""
    try:
        info = pltpu.get_tpu_info()
        cap = getattr(info, "vmem_capacity_bytes", None)
        if cap:
            return int(cap)
    except Exception:
        pass
    try:
        kind = jax.devices()[0].device_kind.lower()
    except Exception:
        return 64 << 20
    if "v7" in kind:
        return 64 << 20
    if any(t in kind for t in ("v5 lite", "v5e", "v5litepod", "v6", "trillium")):
        return 128 << 20
    return 64 << 20


def _divisor_candidates(total, align, cap):
    """Divisors of `total` that are multiples of `align`, descending, <= cap.
    Falls back to the full extent (always a legal block) if none exist."""
    cands = [c for c in range(min(cap, total), align - 1, -1)
             if total % c == 0 and c % align == 0]
    if not cands:
        cands = [total]
    return cands


def _weight_chunk_bytes(tI, H, w_bytes):
    # double-buffered fused gate_up (H, 2*tI) + down (tI, H) chunks
    return 2 * 3 * H * tI * w_bytes


def _working_set_bytes(tM, tI, H, x_bytes, out_bytes, normed_bytes, w_bytes):
    weights = _weight_chunk_bytes(tI, H, w_bytes)
    # x, out (2x-buffered), normed scratch, f32 accumulator
    acts = tM * H * (2 * x_bytes + 2 * out_bytes + normed_bytes + 4)
    # in-kernel intermediates: gu (tM, 2*tI) f32 + h (tM, tI)
    interm = tM * tI * (2 * 4 + max(w_bytes, 2))
    return weights + acts + interm + (2 << 20)                 # fixed headroom


def _choose_block_i(I, H, w_bytes, vmem_phys):
    """Largest intermediate chunk whose double-buffered weights fit ~25% of VMEM,
    leaving the rest for a large row tile (v7x -> 256 @ H=4096, v6e/v5e -> 512)."""
    budget = vmem_phys // 4
    cands = _divisor_candidates(I, 128, 2048)
    for tI in cands:
        if _weight_chunk_bytes(tI, H, w_bytes) <= budget:
            return tI
    return cands[-1]


def _choose_block_m(M, tI, H, x_bytes, out_bytes, normed_bytes, w_bytes, vmem_phys):
    """Largest row tile (arithmetic intensity ~ tM FLOP/weight-byte) that fits."""
    budget = int(vmem_phys * 0.8)
    row_align = 16 if x_bytes < 4 else 8
    cands = _divisor_candidates(M, row_align, 1024)
    for tM in cands:
        if _working_set_bytes(tM, tI, H, x_bytes, out_bytes,
                              normed_bytes, w_bytes) <= budget:
            return tM
    return cands[-1]


# ---------------------------------------------------------------------------
# Weight pre-blocking (do once at init, not per forward call)
# ---------------------------------------------------------------------------
def fuse_and_block_gate_up(w_gate, w_up, block_i):
    """(H, I) + (H, I) -> (I // block_i, H, 2*block_i).

    Slab [i] holds gate columns then up columns of intermediate chunk i, so the
    per-grid-step weight fetch is one contiguous HBM burst instead of H strided
    1-KiB rows, and a single MXU pass covers both projections."""
    H, I = w_gate.shape
    if I % block_i != 0:
        raise ValueError(f"intermediate_size={I} must be divisible by block_i={block_i}")
    nI = I // block_i
    g = w_gate.reshape(H, nI, block_i).transpose(1, 0, 2)
    u = w_up.reshape(H, nI, block_i).transpose(1, 0, 2)
    return jnp.concatenate([g, u], axis=-1)


# ---------------------------------------------------------------------------
# Wrapper
# ---------------------------------------------------------------------------
def llama_decoder_layer(hidden_states, gamma, beta, w_gate_up_blocked, w_down,
                        *, eps=1e-5, activation="silu", block_m=None,
                        vmem_limit_bytes=None):
    """hidden_states: (..., H); w_gate_up_blocked: (I//tI, H, 2*tI) from
    fuse_and_block_gate_up(); w_down: (I, H)."""
    orig_shape = hidden_states.shape
    H = orig_shape[-1]
    M = int(np.prod(orig_shape[:-1]))
    nI, Hw, two_tI = w_gate_up_blocked.shape
    tI = two_tI // 2
    I = nI * tI
    assert Hw == H, f"gate_up hidden dim {Hw} != activation hidden dim {H}"
    assert w_down.shape == (I, H), f"w_down shape {w_down.shape} != {(I, H)}"

    x2 = hidden_states.reshape(M, H)
    gamma2 = jnp.asarray(gamma).reshape(1, H)
    beta2 = jnp.asarray(beta).reshape(1, H)

    x_bytes = x2.dtype.itemsize
    out_bytes = x_bytes
    w_bytes = w_gate_up_blocked.dtype.itemsize
    # bf16 weights -> bf16 normed scratch (native MXU dtype); f32 otherwise.
    normed_dtype = jnp.bfloat16 if w_gate_up_blocked.dtype == jnp.bfloat16 else jnp.float32
    normed_bytes = np.dtype(normed_dtype).itemsize

    vmem_phys = _physical_vmem_bytes()
    row_align = 16 if x_bytes < 4 else 8
    if block_m is None:
        tM = _choose_block_m(M, tI, H, x_bytes, out_bytes, normed_bytes,
                             w_bytes, vmem_phys)
    else:
        tM = int(block_m)
        if M % tM != 0:
            raise ValueError(f"block_m={tM} must divide M={M}")
        if tM != M and tM % row_align != 0:
            raise ValueError(
                f"block_m={tM} must be a multiple of {row_align} (or the full extent {M})")

    # Always set an explicit scoped-VMEM limit derived from the actual working set.
    if vmem_limit_bytes is None:
        ws = _working_set_bytes(tM, tI, H, x_bytes, out_bytes, normed_bytes, w_bytes)
        vmem_limit_bytes = int(min(max(int(ws * 1.2), 16 << 20), vmem_phys))

    kernel = functools.partial(_decoder_layer_kernel, eps=eps,
                               act_name=activation, tile_i=tI)

    grid_spec = pltpu.PrefetchScalarGridSpec(
        num_scalar_prefetch=0,
        grid=(M // tM, nI),
        in_specs=[
            pl.BlockSpec((tM, H), lambda m, i: (m, 0)),            # x (resident across i)
            pl.BlockSpec((1, H), lambda m, i: (0, 0)),             # gamma
            pl.BlockSpec((1, H), lambda m, i: (0, 0)),             # beta
            pl.BlockSpec((1, H, 2 * tI), lambda m, i: (i, 0, 0)),  # fused gate|up chunk
            pl.BlockSpec((tI, H), lambda m, i: (i, 0)),            # W_down chunk
        ],
        out_specs=pl.BlockSpec((tM, H), lambda m, i: (m, 0)),
        scratch_shapes=[
            pltpu.VMEM((tM, H), normed_dtype),                     # LayerNorm(x) row tile
            pltpu.VMEM((tM, H), jnp.float32),                      # f32 accumulator
        ],
    )

    # TODO(synk): decode-shaped inputs (M // tM < 2) on v7x leave one TensorCore
    # idle with this layout; shard the intermediate axis across cores with
    # per-core partial accumulators for that case.
    out2 = pl.pallas_call(
        kernel,
        out_shape=jax.ShapeDtypeStruct((M, H), hidden_states.dtype),
        grid_spec=grid_spec,
        compiler_params=pltpu.CompilerParams(
            dimension_semantics=("parallel", "arbitrary"),
            vmem_limit_bytes=vmem_limit_bytes,
        ),
    )(x2, gamma2, beta2, w_gate_up_blocked, w_down)
    return out2.reshape(orig_shape)


# ---------------------------------------------------------------------------
# Module-like container (mirrors the PyTorch LlamaDecoderLayer parameters)
# ---------------------------------------------------------------------------
class LlamaDecoderLayer:
    """Construct with dtype=jnp.bfloat16 for the production perf point
    (bf16 weights + activations, f32 accumulation inside the kernel)."""

    def __init__(self, hidden_size, intermediate_size, activation, *,
                 key, dtype=jnp.float32, block_i=None):
        self.hidden_size = hidden_size
        self.intermediate_size = intermediate_size
        self.activation = activation
        self.eps = 1e-5

        k1, k2, k3, k4 = jax.random.split(key, 4)
        # LayerNorm affine params (non-trivial so the affine path is exercised)
        self.gamma = (1.0 + 0.1 * jax.random.normal(k3, (hidden_size,))).astype(dtype)
        self.beta = (0.1 * jax.random.normal(k4, (hidden_size,))).astype(dtype)
        # Linear weights stored already transposed to (in, out) for x @ W
        s_gu = 1.0 / np.sqrt(hidden_size)
        s_d = 1.0 / np.sqrt(intermediate_size)
        w_gu = jax.random.uniform(k1, (hidden_size, 2 * intermediate_size),
                                  dtype, -s_gu, s_gu)
        self.w_gate = w_gu[:, :intermediate_size]     # first half of gate_up
        self.w_up = w_gu[:, intermediate_size:]       # second half of gate_up
        self.w_down = jax.random.uniform(k2, (intermediate_size, hidden_size),
                                         dtype, -s_d, s_d)

        # Intermediate chunk size + HBM-contiguous pre-blocked gate|up weights,
        # computed ONCE at init (not per forward call).
        w_bytes = np.dtype(dtype).itemsize
        if block_i is None:
            block_i = _choose_block_i(intermediate_size, hidden_size, w_bytes,
                                      _physical_vmem_bytes())
        else:
            block_i = int(block_i)
            if intermediate_size % block_i != 0:
                raise ValueError(f"block_i={block_i} must divide I={intermediate_size}")
            if block_i != intermediate_size and block_i % 128 != 0:
                raise ValueError(f"block_i={block_i} must be a multiple of 128 "
                                 f"(or the full extent {intermediate_size})")
        self.block_i = block_i
        self.w_gate_up_blocked = fuse_and_block_gate_up(self.w_gate, self.w_up, block_i)

    def __call__(self, hidden_states, **kw):
        return llama_decoder_layer(
            hidden_states, self.gamma, self.beta,
            self.w_gate_up_blocked, self.w_down,
            eps=self.eps, activation=self.activation, **kw)


# ---------------------------------------------------------------------------
# Pure-numpy reference reproducing the PyTorch forward semantics
# ---------------------------------------------------------------------------
def _reference_forward(x, gamma, beta, w_gate, w_up, w_down, eps=1e-5):
    x = np.asarray(x, dtype=np.float64)
    gamma = np.asarray(gamma, dtype=np.float64)
    beta = np.asarray(beta, dtype=np.float64)
    w_gate = np.asarray(w_gate, dtype=np.float64)
    w_up = np.asarray(w_up, dtype=np.float64)
    w_down = np.asarray(w_down, dtype=np.float64)

    mean = x.mean(-1, keepdims=True)
    var = ((x - mean) ** 2).mean(-1, keepdims=True)
    n = (x - mean) / np.sqrt(var + eps) * gamma + beta
    gate = n @ w_gate
    up = n @ w_up
    h = (gate / (1.0 + np.exp(-gate))) * up          # silu(gate) * up
    return h @ w_down + x


if __name__ == "__main__":
    key = jax.random.PRNGKey(0)
    k_param, k_x = jax.random.split(key)

    # Small, TPU-tile-friendly shapes consistent with the module.
    batch, seq, hidden, intermediate = 2, 8, 128, 256
    # block_i=128 so the intermediate (reduction) grid axis is actually exercised.
    layer = LlamaDecoderLayer(hidden, intermediate, "silu", key=k_param,
                              dtype=jnp.float32, block_i=128)
    x = jax.random.normal(k_x, (batch, seq, hidden), dtype=jnp.float32)

    # block_m=8 so the row grid axis is also exercised: grid = (2, 2).
    y = jax.block_until_ready(layer(x, block_m=8))

    ref = _reference_forward(np.asarray(x), layer.gamma, layer.beta,
                             layer.w_gate, layer.w_up, layer.w_down, eps=layer.eps)
    np.testing.assert_allclose(np.asarray(y, dtype=np.float64), ref,
                               rtol=2e-2, atol=2e-2)  # tolerance covers MXU f32 passes

    print("KERNEL_OK")
</pallas_src>

<mosaic_0001>
module attributes {stable_mosaic.version = 11 : i64} {
  func.func @_decoder_layer_kernel(%arg0: i32, %arg1: i32, %arg2: memref<8x128xf32, #tpu.memory_space<vmem>>, %arg3: memref<1x128xf32, #tpu.memory_space<vmem>>, %arg4: memref<1x128xf32, #tpu.memory_space<vmem>>, %arg5: memref<1x128x256xf32, #tpu.memory_space<vmem>>, %arg6: memref<128x128xf32, #tpu.memory_space<vmem>>, %arg7: memref<8x128xf32, #tpu.memory_space<vmem>>, %arg8: memref<8x128xf32, #tpu.memory_space<vmem>>, %arg9: memref<8x128xf32, #tpu.memory_space<vmem>>) attributes {dimension_semantics = [#tpu.dimension_semantics<parallel>, #tpu.dimension_semantics<arbitrary>], iteration_bounds = array<i64: 2, 2>, scalar_prefetch = 0 : i64, scratch_operands = 2 : i64, tpu.core_type = #tpu.core_type<tc>, window_params = [{transform_indices = @transform_0, window_bounds = array<i64: 8, 128>}, {pipeline_mode = #tpu.pipeline_mode<synchronous>, transform_indices = @transform_1, window_bounds = array<i64: 1, 128>}, {pipeline_mode = #tpu.pipeline_mode<synchronous>, transform_indices = @transform_2, window_bounds = array<i64: 1, 128>}, {transform_indices = @transform_3, window_bounds = array<i64: 1, 128, 256>}, {transform_indices = @transform_4, window_bounds = array<i64: 128, 128>}, {transform_indices = @transform_5, window_bounds = array<i64: 8, 128>}]} {
    %c0_i32 = arith.constant 0 : i32
    %0 = arith.cmpi eq, %arg1, %c0_i32 : i32
    %1 = arith.extui %0 : i1 to i32
    %c0_i32_0 = arith.constant 0 : i32
    %2 = arith.cmpi ne, %1, %c0_i32_0 : i32
    scf.if %2 {
      %c0_14 = arith.constant 0 : index
      %c0_15 = arith.constant 0 : index
      %24 = vector.load %arg2[%c0_14, %c0_15] : memref<8x128xf32, #tpu.memory_space<vmem>>, vector<8x128xf32>
      %cst_16 = arith.constant dense<0.000000e+00> : vector<8xf32>
      %25 = vector.multi_reduction <add>, %24, %cst_16 [1] : vector<8x128xf32> to vector<8xf32>
      %26 = vector.shape_cast %25 : vector<8xf32> to vector<8x1xf32>
      %cst_17 = arith.constant 1.280000e+02 : f32
      %27 = vector.broadcast %cst_17 : f32 to vector<8x1xf32>
      %28 = arith.divf %26, %27 : vector<8x1xf32>
      %29 = vector.broadcast %28 : vector<8x1xf32> to vector<8x128xf32>
      %30 = arith.subf %24, %29 : vector<8x128xf32>
      %31 = arith.mulf %30, %30 : vector<8x128xf32>
      %cst_18 = arith.constant dense<0.000000e+00> : vector<8xf32>
      %32 = vector.multi_reduction <add>, %31, %cst_18 [1] : vector<8x128xf32> to vector<8xf32>
      %33 = vector.shape_cast %32 : vector<8xf32> to vector<8x1xf32>
      %cst_19 = arith.constant 1.280000e+02 : f32
      %34 = vector.broadcast %cst_19 : f32 to vector<8x1xf32>
      %35 = arith.divf %33, %34 : vector<8x1xf32>
      %cst_20 = arith.constant 9.99999974E-6 : f32
      %36 = vector.broadcast %cst_20 : f32 to vector<8x1xf32>
      %37 = arith.addf %35, %36 : vector<8x1xf32>
      %38 = math.rsqrt %37 : vector<8x1xf32>
      %c0_21 = arith.constant 0 : index
      %c0_22 = arith.constant 0 : index
      %39 = vector.load %arg3[%c0_21, %c0_22] : memref<1x128xf32, #tpu.memory_space<vmem>>, vector<1x128xf32>
      %c0_23 = arith.constant 0 : index
      %c0_24 = arith.constant 0 : index
      %40 = vector.load %arg4[%c0_23, %c0_24] : memref<1x128xf32, #tpu.memory_space<vmem>>, vector<1x128xf32>
      %41 = vector.broadcast %38 : vector<8x1xf32> to vector<8x128xf32>
      %42 = arith.mulf %30, %41 : vector<8x128xf32>
      %43 = vector.broadcast %39 : vector<1x128xf32> to vector<8x128xf32>
      %44 = arith.mulf %42, %43 : vector<8x128xf32>
      %45 = vector.broadcast %40 : vector<1x128xf32> to vector<8x128xf32>
      %46 = arith.addf %44, %45 : vector<8x128xf32>
      %c0_25 = arith.constant 0 : index
      %c0_26 = arith.constant 0 : index
      %47 = vector.load %arg8[%c0_25, %c0_26] : memref<8x128xf32, #tpu.memory_space<vmem>>, vector<8x128xf32>
      tpu.vector_store %arg8[%c0_25, %c0_26], %46 {strides = array<i32>} : memref<8x128xf32, #tpu.memory_space<vmem>>, vector<8x128xf32>,
      %c0_27 = arith.constant 0 : index
      %c0_28 = arith.constant 0 : index
      %48 = vector.load %arg9[%c0_27, %c0_28] : memref<8x128xf32, #tpu.memory_space<vmem>>, vector<8x128xf32>
      tpu.vector_store %arg9[%c0_27, %c0_28], %24 {strides = array<i32>} : memref<8x128xf32, #tpu.memory_space<vmem>>, vector<8x128xf32>,
    } else {
    }
    %c0 = arith.constant 0 : index
    %c0_1 = arith.constant 0 : index
    %3 = vector.load %arg8[%c0, %c0_1] : memref<8x128xf32, #tpu.memory_space<vmem>>, vector<8x128xf32>
    %c0_2 = arith.constant 0 : index
    %c0_3 = arith.constant 0 : index
    %c0_4 = arith.constant 0 : index
    %4 = vector.load %arg5[%c0_2, %c0_3, %c0_4] : memref<1x128x256xf32, #tpu.memory_space<vmem>>, vector<1x128x256xf32>
    %5 = vector.shape_cast %4 : vector<1x128x256xf32> to vector<128x256xf32>
    %cst = arith.constant dense<0.000000e+00> : vector<8x256xf32>
    %6 = tpu.matmul %3, %5, %cst {dimension_numbers = #tpu.dot_dimension_numbers<[1], [0], [0], [1], [0, 0, 1, 1], [], []>} : vector<8x128xf32>, vector<128x256xf32>, vector<8x256xf32> -> vector<8x256xf32>
    %7 = vector.extract_strided_slice %6 {offsets = [0, 0], sizes = [8, 128], strides = [1, 1]} : vector<8x256xf32> to vector<8x128xf32>
    %8 = vector.extract_strided_slice %6 {offsets = [0, 128], sizes = [8, 128], strides = [1, 1]} : vector<8x256xf32> to vector<8x128xf32>
    %9 = arith.negf %7 : vector<8x128xf32>
    %10 = math.exp %9 : vector<8x128xf32>
    %cst_5 = arith.constant 1.000000e+00 : f32
    %11 = vector.broadcast %cst_5 : f32 to vector<8x128xf32>
    %12 = arith.addf %11, %10 : vector<8x128xf32>
    %13 = arith.divf %11, %12 : vector<8x128xf32>
    %14 = arith.mulf %7, %13 : vector<8x128xf32>
    %15 = arith.mulf %14, %8 : vector<8x128xf32>
    %c0_6 = arith.constant 0 : index
    %c0_7 = arith.constant 0 : index
    %16 = vector.load %arg9[%c0_6, %c0_7] : memref<8x128xf32, #tpu.memory_space<vmem>>, vector<8x128xf32>
    %c0_8 = arith.constant 0 : index
    %c0_9 = arith.constant 0 : index
    %17 = vector.load %arg6[%c0_8, %c0_9] : memref<128x128xf32, #tpu.memory_space<vmem>>, vector<128x128xf32>
    %cst_10 = arith.constant dense<0.000000e+00> : vector<8x128xf32>
    %18 = tpu.matmul %15, %17, %cst_10 {dimension_numbers = #tpu.dot_dimension_numbers<[1], [0], [0], [1], [0, 0, 1, 1], [], []>} : vector<8x128xf32>, vector<128x128xf32>, vector<8x128xf32> -> vector<8x128xf32>
    %19 = arith.addf %16, %18 : vector<8x128xf32>
    %c0_11 = arith.constant 0 : index
    %c0_12 = arith.constant 0 : index
    %20 = vector.load %arg9[%c0_11, %c0_12] : memref<8x128xf32, #tpu.memory_space<vmem>>, vector<8x128xf32>
    tpu.vector_store %arg9[%c0_11, %c0_12], %19 {strides = array<i32>} : memref<8x128xf32, #tpu.memory_space<vmem>>, vector<8x128xf32>,
    %c1_i32 = arith.constant 1 : i32
    %21 = arith.cmpi eq, %arg1, %c1_i32 : i32
    %22 = arith.extui %21 : i1 to i32
    %c0_i32_13 = arith.constant 0 : i32
    %23 = arith.cmpi ne, %22, %c0_i32_13 : i32
    scf.if %23 {
      %c0_14 = arith.constant 0 : index
      %c0_15 = arith.constant 0 : index
      %24 = vector.load %arg9[%c0_14, %c0_15] : memref<8x128xf32, #tpu.memory_space<vmem>>, vector<8x128xf32>
      %c0_16 = arith.constant 0 : index
      %c0_17 = arith.constant 0 : index
      %25 = vector.load %arg7[%c0_16, %c0_17] : memref<8x128xf32, #tpu.memory_space<vmem>>, vector<8x128xf32>
      tpu.vector_store %arg7[%c0_16, %c0_17], %24 {strides = array<i32>} : memref<8x128xf32, #tpu.memory_space<vmem>>, vector<8x128xf32>,
    } else {
    }
    return
  }
  func.func @transform_0(%arg0: i32, %arg1: i32) -> (i32, i32) {
    %c0_i32 = arith.constant 0 : i32
    %c0_i32_0 = arith.constant 0 : i32
    return %arg0, %c0_i32 : i32, i32
  }
  func.func @transform_1(%arg0: i32, %arg1: i32) -> (i32, i32) {
    %c0_i32 = arith.constant 0 : i32
    %c0_i32_0 = arith.constant 0 : i32
    %c0_i32_1 = arith.constant 0 : i32
    return %c0_i32, %c0_i32_0 : i32, i32
  }
  func.func @transform_2(%arg0: i32, %arg1: i32) -> (i32, i32) {
    %c0_i32 = arith.constant 0 : i32
    %c0_i32_0 = arith.constant 0 : i32
    %c0_i32_1 = arith.constant 0 : i32
    return %c0_i32, %c0_i32_0 : i32, i32
  }
  func.func @transform_3(%arg0: i32, %arg1: i32) -> (i32, i32, i32) {
    %c0_i32 = arith.constant 0 : i32
    %c0_i32_0 = arith.constant 0 : i32
    %c0_i32_1 = arith.constant 0 : i32
    return %arg1, %c0_i32, %c0_i32_0 : i32, i32, i32
  }
  func.func @transform_4(%arg0: i32, %arg1: i32) -> (i32, i32) {
    %c0_i32 = arith.constant 0 : i32
    %c0_i32_0 = arith.constant 0 : i32
    return %arg1, %c0_i32 : i32, i32
  }
  func.func @transform_5(%arg0: i32, %arg1: i32) -> (i32, i32) {
    %c0_i32 = arith.constant 0 : i32
    %c0_i32_0 = arith.constant 0 : i32
    return %arg0, %c0_i32 : i32, i32
  }
}

</mosaic_0001>

<llo_original>
// kernel: tpu_custom_call.1
$region0: #{tpu_custom_call.1}
  #allocation0 [shape = 'u32[]', space=smem, size = 0x4, offset = 0x4, fixed_abs, tag = 'smem constant byte address 0x4 - core index']
  #allocation1 [shape = 'u32[144,128]{1,0:T(1,128)}', space=vmem, size = 0x12000, scoped, tag = 'internal scratch']
  #allocation2 [shape = 'f32[8,128]{1,0:T(8,128)}', space=vmem, size = 0x1000, scoped, tag = 'scratch operand']
  #allocation3 [shape = 'f32[8,128]{1,0:T(8,128)}', space=vmem, size = 0x1000, scoped, tag = 'scratch operand']
  %s0 = inlined_call_operand.hbm [shape: f32[16,128], index: 0, kind: input, shape index: {}]
  %s1 = inlined_call_operand.vmem [shape: f32[1,128], index: 1, kind: input, shape index: {}]
  %s2 = inlined_call_operand.vmem [shape: f32[1,128], index: 2, kind: input, shape index: {}]
  %s3 = inlined_call_operand.hbm [shape: f32[2,128,256], index: 3, kind: input, shape index: {}]
  %s4 = inlined_call_operand.hbm [shape: f32[256,128], index: 4, kind: input, shape index: {}]
  %s5 = inlined_call_operand.hbm [shape: f32[16,128], index: 5, kind: output, shape index: {}]
  %s6 = sld [smem:[#allocation0]]
  $region73: #{tpu_custom_call.1} parent=0
    _
  %s8 = ssub.s32 1, %s6
  %s9 = scalar_select 0, %s8, %s6
  $region1: #{tpu_custom_call.1} parent=0
    #allocation4 [shape = 'u8[8192]{0}', space=vmem, size = 0x2000, scoped, tag = 'input window, operand 0']
    #allocation5 [shape = 's32[2]{0}', space=sflag, size = 0x8, scoped, tag = 'scoped memory for tpu_custom_call.1']
    #allocation6 [shape = 's32[2]{0}', space=sflag, size = 0x8, scoped, tag = 'scoped memory for tpu_custom_call.1']
    #allocation7 [shape = 'u8[262144]{0}', space=vmem, size = 0x40000, scoped, tag = 'input window, operand 3']
    #allocation8 [shape = 's32[2]{0}', space=sflag, size = 0x8, scoped, tag = 'scoped memory for tpu_custom_call.1']
    #allocation9 [shape = 'u8[131072]{0}', space=vmem, size = 0x20000, scoped, tag = 'input window, operand 4']
    #allocation10 [shape = 'u8[8192]{0}', space=vmem, size = 0x2000, scoped, tag = 'output window, operand 0']
    %10 = vsyncpa [#allocation5], 0
    %s11 = scalar_lea.sflag [#allocation5], 1
    %12 = vsyncpa %s11, 0
    %13 = vsyncpa [#allocation8], 0
    %s14 = scalar_lea.sflag [#allocation8], 1
    %15 = vsyncpa %s14, 0
    %16 = vsyncpa [#allocation6], 0
    %s17 = scalar_lea.sflag [#allocation6], 1
    %18 = vsyncpa %s17, 0
    loop: start=0, step=1, limit=6
    $region2: #{tpu_custom_call.1} parent=1 // loop_pre_header
      _
    $region3: #{tpu_custom_call.1} parent=1 // loop_header
      %s20 = sphi 0, %s24
      %p21 = scmp.ge.s32.totalorder %s20, 6
      %s27 = sphi 0, %s39
      %s28 = sphi 0, %s35
      %s29 = sphi 0, %s27
      %s30 = sphi 0, %s28
      %s31 = sphi 0, %s29
      %s32 = sphi 0, %s30
      %s42 = sphi 0, %s44
      %s45 = sphi 0, %s42
      %s46 = sphi 0, %s45
      %s62 = sphi 0, %s46
      %s66 = sphi 0, %s66
      %s68 = sphi 0, %s66
      %s69 = sphi 0, %s68
      %s83 = sphi 0, %s69
      %s87 = sphi 0, %s87
      %s89 = sphi 0, %s87
      %s90 = sphi 0, %s89
      %s104 = sphi 0, %s90
      %s110 = sphi 0, %s112
      %s113 = sphi 0, %s110
      %s114 = sphi 0, %s113
      %s130 = sphi 0, %s114
      %s136 = sphi 0, %s138
      %s139 = sphi 0, %s136
      %s140 = sphi 0, %s139
      %s156 = sphi 0, %s140
      %s162 = sphi 0, %s164
      %s165 = sphi 0, %s162
      %s166 = sphi 0, %s165
      %s182 = sphi 0, %s166
    $region4: #{tpu_custom_call.1} parent=1 // loop_header_branch
      %23 = sbr.rel (%p21) target = $region8
    $region5: #{tpu_custom_call.1} parent=1 // loop_body
      %s25 = ssub.s32 %s20, 1
      %s26 = ssub.s32 %s20, 2
      %s33 = sadd.s32 1, %s28
      %p34 = scmp.ge.s32.totalorder %s33, 2
      %s35 = scalar_select %p34, 0, %s33
      %s36 = sadd.s32 1, %s27
      %s37 = scalar_select %p34, %s36, %s27
      %p38 = scmp.ge.s32.totalorder %s37, 2
      %s39 = scalar_select %p38, 0, %s37
      %s40 = ssub.s32 %s27, %s39
      %p41 = scmp.eq.s32.totalorder %s40, 0
      %s43 = sadd.s32 %s42, 1
      %s44 = scalar_select %p41, %s42, %s43
      %p47 = pneg %p41
      %p48 = scmp.eq.s32.totalorder %s20, 3
      %p49 = por %p47, %p48
      %p50 = scmp.ne.s32.totalorder %s42, %s45
      %p51 = scmp.eq.s32.totalorder %s20, 0
      %p52 = por %p50, %p51
      %p53 = scmp.ne.s32.totalorder %s42, %s45
      %p54 = scmp.eq.s32.totalorder %s25, 3
      %p55 = por %p53, %p54
      %p56 = scmp.ne.s32.totalorder %s45, %s46
      %p57 = scmp.eq.s32.totalorder %s25, 0
      %p58 = por %p56, %p57
      %p59 = scmp.ne.s32.totalorder %s45, %s46
      %p60 = scmp.eq.s32.totalorder %s26, 3
      %p61 = por %p59, %p60
      %p63 = scmp.ne.s32.totalorder %s46, %s62
      %p64 = scmp.eq.s32.totalorder %s26, 0
      %p65 = por %p63, %p64
      %s67 = sadd.s32 %s66, 1
      %p70 = scmp.eq.s32.totalorder %s20, 3
      %p71 = scmp.ne.s32.totalorder %s66, %s68
      %p72 = scmp.eq.s32.totalorder %s20, 0
      %p73 = por %p71, %p72
      %p74 = scmp.ne.s32.totalorder %s66, %s68
      %p75 = scmp.eq.s32.totalorder %s25, 3
      %p76 = por %p74, %p75
      %p77 = scmp.ne.s32.totalorder %s68, %s69
      %p78 = scmp.eq.s32.totalorder %s25, 0
      %p79 = por %p77, %p78
      %p80 = scmp.ne.s32.totalorder %s68, %s69
      %p81 = scmp.eq.s32.totalorder %s26, 3
      %p82 = por %p80, %p81
      %p84 = scmp.ne.s32.totalorder %s69, %s83
      %p85 = scmp.eq.s32.totalorder %s26, 0
      %p86 = por %p84, %p85
      %s88 = sadd.s32 %s87, 1
      %p91 = scmp.eq.s32.totalorder %s20, 3
      %p92 = scmp.ne.s32.totalorder %s87, %s89
      %p93 = scmp.eq.s32.totalorder %s20, 0
      %p94 = por %p92, %p93
      %p95 = scmp.ne.s32.totalorder %s87, %s89
      %p96 = scmp.eq.s32.totalorder %s25, 3
      %p97 = por %p95, %p96
      %p98 = scmp.ne.s32.totalorder %s89, %s90
      %p99 = scmp.eq.s32.totalorder %s25, 0
      %p100 = por %p98, %p99
      %p101 = scmp.ne.s32.totalorder %s89, %s90
      %p102 = scmp.eq.s32.totalorder %s26, 3
      %p103 = por %p101, %p102
      %p105 = scmp.ne.s32.totalorder %s90, %s104
      %p106 = scmp.eq.s32.totalorder %s26, 0
      %p107 = por %p105, %p106
      %s108 = ssub.s32 %s28, %s35
      %p109 = scmp.eq.s32.totalorder %s108, 0
      %s111 = sadd.s32 %s110, 1
      %s112 = scalar_select %p109, %s110, %s111
      %p115 = pneg %p109
      %p116 = scmp.eq.s32.totalorder %s20, 3
      %p117 = por %p115, %p116
      %p118 = scmp.ne.s32.totalorder %s110, %s113
      %p119 = scmp.eq.s32.totalorder %s20, 0
      %p120 = por %p118, %p119
      %p121 = scmp.ne.s32.totalorder %s110, %s113
      %p122 = scmp.eq.s32.totalorder %s25, 3
      %p123 = por %p121, %p122
      %p124 = scmp.ne.s32.totalorder %s113, %s114
      %p125 = scmp.eq.s32.totalorder %s25, 0
      %p126 = por %p124, %p125
      %p127 = scmp.ne.s32.totalorder %s113, %s114
      %p128 = scmp.eq.s32.totalorder %s26, 3
      %p129 = por %p127, %p128
      %p131 = scmp.ne.s32.totalorder %s114, %s130
      %p132 = scmp.eq.s32.totalorder %s26, 0
      %p133 = por %p131, %p132
      %s134 = ssub.s32 %s28, %s35
      %p135 = scmp.eq.s32.totalorder %s134, 0
      %s137 = sadd.s32 %s136, 1
      %s138 = scalar_select %p135, %s136, %s137
      %p141 = pneg %p135
      %p142 = scmp.eq.s32.totalorder %s20, 3
      %p143 = por %p141, %p142
      %p144 = scmp.ne.s32.totalorder %s136, %s139
      %p145 = scmp.eq.s32.totalorder %s20, 0
      %p146 = por %p144, %p145
      %p147 = scmp.ne.s32.totalorder %s136, %s139
      %p148 = scmp.eq.s32.totalorder %s25, 3
      %p149 = por %p147, %p148
      %p150 = scmp.ne.s32.totalorder %s139, %s140
      %p151 = scmp.eq.s32.totalorder %s25, 0
      %p152 = por %p150, %p151
      %p153 = scmp.ne.s32.totalorder %s139, %s140
      %p154 = scmp.eq.s32.totalorder %s26, 3
      %p155 = por %p153, %p154
      %p157 = scmp.ne.s32.totalorder %s140, %s156
      %p158 = scmp.eq.s32.totalorder %s26, 0
      %p159 = por %p157, %p158
      %s160 = ssub.s32 %s27, %s39
      %p161 = scmp.eq.s32.totalorder %s160, 0
      %s163 = sadd.s32 %s162, 1
      %s164 = scalar_select %p161, %s162, %s163
      %p167 = pneg %p161
      %p168 = scmp.eq.s32.totalorder %s20, 3
      %p169 = por %p167, %p168
      %p170 = scmp.ne.s32.totalorder %s162, %s165
      %p171 = scmp.eq.s32.totalorder %s20, 0
      %p172 = por %p170, %p171
      %p173 = scmp.ne.s32.totalorder %s162, %s165
      %p174 = scmp.eq.s32.totalorder %s25, 3
      %p175 = por %p173, %p174
      %p176 = scmp.ne.s32.totalorder %s165, %s166
      %p177 = scmp.eq.s32.totalorder %s25, 0
      %p178 = por %p176, %p177
      %p179 = scmp.ne.s32.totalorder %s165, %s166
      %p180 = scmp.eq.s32.totalorder %s26, 3
      %p181 = por %p179, %p180
      %p183 = scmp.ne.s32.totalorder %s166, %s182
      %p184 = scmp.eq.s32.totalorder %s26, 0
      %p185 = por %p183, %p184
      %p186 = scmp.le.s32.totalorder 1, %s20
      %p187 = scmp.lt.s32.totalorder %s20, 5
      %p188 = pnand %p186, %p187
      %p189 = pneg %p188
      // Predicated region
      $region9: #{tpu_custom_call.1} parent=5 // pred_check
        _
      $region10: #{tpu_custom_call.1} parent=5 // pred_check_branch
        %191 = sbr.rel (%p188) target = $region12
      $region11: #{tpu_custom_call.1} parent=5 // pred_region
        %s192 = ssub.s32 %s20, 1
        // Predicated region
        $region13: #{tpu_custom_call.1} parent=11 // pred_check
          %p193 = pneg %p79
        $region14: #{tpu_custom_call.1} parent=11 // pred_check_branch
          %195 = sbr.rel (%p193) target = $region16
        $region15: #{tpu_custom_call.1} parent=11 // pred_region
          _
        $region16: #{tpu_custom_call.1} parent=11 // pred_fallthru
          _
        // Predicated region
        $region17: #{tpu_custom_call.1} parent=11 // pred_check
          %p196 = pneg %p100
        $region18: #{tpu_custom_call.1} parent=11 // pred_check_branch
          %198 = sbr.rel (%p196) target = $region20
        $region19: #{tpu_custom_call.1} parent=11 // pred_region
          _
        $region20: #{tpu_custom_call.1} parent=11 // pred_fallthru
          _
      $region12: #{tpu_custom_call.1} parent=5 // pred_fallthru
        _
      %p199 = scmp.lt.s32.totalorder %s20, 4
      // Predicated region
      $region21: #{tpu_custom_call.1} parent=5 // pred_check
        %p200 = pneg %p199
      $region22: #{tpu_custom_call.1} parent=5 // pred_check_branch
        %202 = sbr.rel (%p200) target = $region24
      $region23: #{tpu_custom_call.1} parent=5 // pred_region
        // Predicated region
        $region25: #{tpu_custom_call.1} parent=23 // pred_check
          %p203 = pneg %p52
        $region26: #{tpu_custom_call.1} parent=23 // pred_check_branch
          %205 = sbr.rel (%p203) target = $region28
        $region27: #{tpu_custom_call.1} parent=23 // pred_region
          %s206 = sand.u32 %s42, 1
          %s207 = scalar_lea.sflag [#allocation5], %s206
          %s208 = sand.u32 %s42, 1
          %s209 = smul.addr %s208, 8
          %s210 = scalar_lea.vmem [#allocation4], %s209
          %s212 = ssub.s32 128, 128
          %213 = vsyncadd %s207, %s212
          %s214 = smul.addr %s27, 128
          %s215 = scalar_lea.hbm %s0, %s214
          %s217 = sshll.u32 %s210, 4
          %s218 = int_to_ptr.vmem [resolvable:$true] %s217
          %220 = dma.hbm_to_vmem [thread:$0]  %s215, 128, %s218, %s207
        $region28: #{tpu_custom_call.1} parent=23 // pred_fallthru
          _
        // Predicated region
        $region29: #{tpu_custom_call.1} parent=23 // pred_check
          %p221 = pneg %p120
        $region30: #{tpu_custom_call.1} parent=23 // pred_check_branch
          %223 = sbr.rel (%p221) target = $region32
        $region31: #{tpu_custom_call.1} parent=23 // pred_region
          %s224 = sand.u32 %s20, 1
          %s225 = scalar_lea.sflag [#allocation8], %s224
          %s226 = sand.u32 %s110, 1
          %s227 = smul.addr %s226, 256
          %s228 = scalar_lea.vmem [#allocation7], %s227
          %s230 = ssub.s32 4096, 4096
          %231 = vsyncadd %s225, %s230
          %s232 = smul.addr %s28, 32
          %s233 = smul.addr %s232, 128
          %s234 = scalar_lea.hbm %s3, %s233
          %s235 = sshll.u32 %s228, 4
          %s236 = int_to_ptr.vmem [resolvable:$true] %s235
          %241 = dma.hbm_to_vmem [thread:$0]  %s234, 4096, %s236, %s225, 256, 256, 16
        $region32: #{tpu_custom_call.1} parent=23 // pred_fallthru
          _
        // Predicated region
        $region33: #{tpu_custom_call.1} parent=23 // pred_check
          %p242 = pneg %p146
        $region34: #{tpu_custom_call.1} parent=23 // pred_check_branch
          %244 = sbr.rel (%p242) target = $region36
        $region35: #{tpu_custom_call.1} parent=23 // pred_region
          %s245 = sand.u32 %s20, 1
          %s246 = scalar_lea.sflag [#allocation8], %s245
          %s247 = sand.u32 %s136, 1
          %s248 = smul.addr %s247, 128
          %s249 = scalar_lea.vmem [#allocation9], %s248
          %s250 = smul.u32 16, %s28
          %s252 = ssub.s32 2048, 2048
          %253 = vsyncadd %s246, %s252
          %s254 = smul.addr %s250, 128
          %s255 = scalar_lea.hbm %s4, %s254
          %s256 = sshll.u32 %s249, 4
          %s257 = int_to_ptr.vmem [resolvable:$true] %s256
          %262 = dma.hbm_to_vmem [thread:$0]  %s255, 2048, %s257, %s246, 128, 128, 8
        $region36: #{tpu_custom_call.1} parent=23 // pred_fallthru
          _
      $region24: #{tpu_custom_call.1} parent=5 // pred_fallthru
        _
      %p263 = scmp.le.s32.totalorder 1, %s20
      %p264 = scmp.lt.s32.totalorder %s20, 5
      %p265 = pnand %p263, %p264
      %p266 = pneg %p265
      // Predicated region
      $region37: #{tpu_custom_call.1} parent=5 // pred_check
        _
      $region38: #{tpu_custom_call.1} parent=5 // pred_check_branch
        %268 = sbr.rel (%p265) target = $region40
      $region39: #{tpu_custom_call.1} parent=5 // pred_region
        %s269 = ssub.s32 %s20, 1
        %s270 = sand.u32 %s45, 1
        %s271 = scalar_lea.sflag [#allocation5], %s270
        %s272 = sand.u32 %s45, 1
        %s273 = smul.addr %s272, 8
        %s274 = scalar_lea.vmem [#allocation4], %s273
        // Predicated region
        $region41: #{tpu_custom_call.1} parent=39 // pred_check
          %p275 = pneg %p58
        $region42: #{tpu_custom_call.1} parent=39 // pred_check_branch
          %277 = sbr.rel (%p275) target = $region44
        $region43: #{tpu_custom_call.1} parent=39 // pred_region
          %278 = dma.done %s271, 128
        $region44: #{tpu_custom_call.1} parent=39 // pred_fallthru
          _
        %s279 = sand.u32 %s25, 1
        %s280 = scalar_lea.sflag [#allocation8], %s279
        %s281 = sand.u32 %s113, 1
        %s282 = smul.addr %s281, 256
        %s283 = scalar_lea.vmem [#allocation7], %s282
        // Predicated region
        $region45: #{tpu_custom_call.1} parent=39 // pred_check
          %p284 = pneg %p126
        $region46: #{tpu_custom_call.1} parent=39 // pred_check_branch
          %286 = sbr.rel (%p284) target = $region48
        $region47: #{tpu_custom_call.1} parent=39 // pred_region
          %287 = dma.done %s280, 4096
        $region48: #{tpu_custom_call.1} parent=39 // pred_fallthru
          _
        %s288 = sand.u32 %s25, 1
        %s289 = scalar_lea.sflag [#allocation8], %s288
        %s290 = sand.u32 %s139, 1
        %s291 = smul.addr %s290, 128
        %s292 = scalar_lea.vmem [#allocation9], %s291
        // Predicated region
        $region49: #{tpu_custom_call.1} parent=39 // pred_check
          %p293 = pneg %p152
        $region50: #{tpu_custom_call.1} parent=39 // pred_check_branch
          %295 = sbr.rel (%p293) target = $region52
        $region51: #{tpu_custom_call.1} parent=39 // pred_region
          %296 = dma.done %s289, 2048
        $region52: #{tpu_custom_call.1} parent=39 // pred_fallthru
          _
        %s297 = sand.u32 %s45, 1
        %s298 = scalar_lea.sflag [#allocation5], %s297
        %s299 = sand.u32 %s45, 1
        %s300 = smul.addr %s299, 8
        %s301 = scalar_lea.vmem [#allocation4], %s300
        %p302 = pneg %p58
        %p303 = pneg %p55
        %p304 = pneg %p79
        %p305 = pneg %p76
        %p306 = pneg %p100
        %p307 = pneg %p97
        %s308 = sand.u32 %s25, 1
        %s309 = scalar_lea.sflag [#allocation8], %s308
        %s310 = sand.u32 %s113, 1
        %s311 = smul.addr %s310, 256
        %s312 = scalar_lea.vmem [#allocation7], %s311
        %p313 = pneg %p126
        %p314 = pneg %p123
        %s315 = sand.u32 %s25, 1
        %s316 = scalar_lea.sflag [#allocation8], %s315
        %s317 = sand.u32 %s139, 1
        %s318 = smul.addr %s317, 128
        %s319 = scalar_lea.vmem [#allocation9], %s318
        %p320 = pneg %p152
        %p321 = pneg %p149
        %p322 = pneg %p178
        %p323 = pneg %p175
        %s324 = sand.u32 %s165, 1
        %s325 = scalar_lea.sflag [#allocation6], %s324
        %s326 = sand.u32 %s165, 1
        %s327 = smul.addr %s326, 8
        %s328 = scalar_lea.vmem [#allocation10], %s327
        %s329 = smul.u32 16, %s30
        %p330 = scmp.eq.s32.totalorder %s30, 0
        // Predicated region
        $region53: #{tpu_custom_call.1} parent=39 // pred_check
          %p331 = pneg %p330
        $region54: #{tpu_custom_call.1} parent=39 // pred_check_branch
          %333 = sbr.rel (%p331) target = $region56
        $region55: #{tpu_custom_call.1} parent=39 // pred_region
          %v334 = vld [vmem:[%s274] sm:$0xff]
          %335 = vadd.xlane.f32.xlu0 %v334
          %v336 = vpop.xlane.xlu0 %335
          %v337 = vrcp.pop 128.0
          %v338 = vmul.f32 %v336, %v337
          %v339 = vsub.f32 %v334, %v338
          %v340 = vmul.f32 %v339, %v339
          %341 = vadd.xlane.f32.xlu0 %v340
          %v342 = vpop.xlane.xlu0 %341
          %v343 = vmul.f32 %v342, %v337
          %v344 = vadd.f32 %v343, 1e-05
          %v345 = vrsqrt.pop %v344
          %v346 = vld [vmem:[%s1] sm:$0x1]
          %v347 = vld [vmem:[%s2] sm:$0x1]
          %v348 = vmul.f32 %v339, %v345
          %v350 = vlaneseq
          %v351 = vshrl.u32 %v350, 7
          %v352 = vsub.s32 0, %v351
          %v353 = vrot.slane %v346, %v352
          %v355 = vmul.f32 %v348, %v353
          %v357 = vlaneseq
          %v358 = vshrl.u32 %v357, 7
          %v359 = vsub.s32 0, %v358
          %v360 = vrot.slane %v347, %v359
          %v362 = vadd.f32 %v355, %v360
          %363 = vst [vmem:[#allocation2] sm:$0xff] %v362
          %364 = vst [vmem:[#allocation3] sm:$0xff] %v334
        $region56: #{tpu_custom_call.1} parent=39 // pred_fallthru
          _
        %v365 = vld [vmem:[#allocation2] sm:$0xff]
        %v366 = vld [vmem:[%s283] sm:$0xff]
        %v367 = vld [vmem:[%s283 + $0x8] sm:$0xff]
        %v368 = vld [vmem:[%s283 + $0x10] sm:$0xff]
        %v369 = vld [vmem:[%s283 + $0x18] sm:$0xff]
        %v370 = vld [vmem:[%s283 + $0x20] sm:$0xff]
        %v371 = vld [vmem:[%s283 + $0x28] sm:$0xff]
        %v372 = vld [vmem:[%s283 + $0x30] sm:$0xff]
        %v373 = vld [vmem:[%s283 + $0x38] sm:$0xff]
        %v374 = vld [vmem:[%s283 + $0x40] sm:$0xff]
        %v375 = vld [vmem:[%s283 + $0x48] sm:$0xff]
        %v376 = vld [vmem:[%s283 + $0x50] sm:$0xff]
        %v377 = vld [vmem:[%s283 + $0x58] sm:$0xff]
        %v378 = vld [vmem:[%s283 + $0x60] sm:$0xff]
        %v379 = vld [vmem:[%s283 + $0x68] sm:$0xff]
        %v380 = vld [vmem:[%s283 + $0x70] sm:$0xff]
        %v381 = vld [vmem:[%s283 + $0x78] sm:$0xff]
        %v382 = vld [vmem:[%s283 + $0x80] sm:$0xff]
        %v383 = vld [vmem:[%s283 + $0x88] sm:$0xff]
        %v384 = vld [vmem:[%s283 + $0x90] sm:$0xff]
        %v385 = vld [vmem:[%s283 + $0x98] sm:$0xff]
        %v386 = vld [vmem:[%s283 + $0xa0] sm:$0xff]
        %v387 = vld [vmem:[%s283 + $0xa8] sm:$0xff]
        %v388 = vld [vmem:[%s283 + $0xb0] sm:$0xff]
        %v389 = vld [vmem:[%s283 + $0xb8] sm:$0xff]
        %v390 = vld [vmem:[%s283 + $0xc0] sm:$0xff]
        %v391 = vld [vmem:[%s283 + $0xc8] sm:$0xff]
        %v392 = vld [vmem:[%s283 + $0xd0] sm:$0xff]
        %v393 = vld [vmem:[%s283 + $0xd8] sm:$0xff]
        %v394 = vld [vmem:[%s283 + $0xe0] sm:$0xff]
        %v395 = vld [vmem:[%s283 + $0xe8] sm:$0xff]
        %v396 = vld [vmem:[%s283 + $0xf0] sm:$0xff]
        %v397 = vld [vmem:[%s283 + $0xf8] sm:$0xff]
        %398 = vmatprep.subr.mxu0 %v397
        %399 = vmatpush1.msra.mxu0 %v396
        %400 = vmatprep.subr.mxu0 %v395
        %401 = vmatpush1.msra.mxu0 %v394
        %402 = vmatprep.subr.mxu0 %v393
        %403 = vmatpush1.msra.mxu0 %v392
        %404 = vmatprep.subr.mxu0 %v391
        %405 = vmatpush1.msra.mxu0 %v390
        %406 = vmatprep.subr.mxu0 %v389
        %407 = vmatpush1.msra.mxu0 %v388
        %408 = vmatprep.subr.mxu0 %v387
        %409 = vmatpush1.msra.mxu0 %v386
        %410 = vmatprep.subr.mxu0 %v385
        %411 = vmatpush1.msra.mxu0 %v384
        %412 = vmatprep.subr.mxu0 %v383
        %413 = vmatpush1.msra.mxu0 %v382
        %414 = vmatprep.subr.mxu0 %v381
        %415 = vmatpush1.msra.mxu0 %v380
        %416 = vmatprep.subr.mxu0 %v379
        %417 = vmatpush1.msra.mxu0 %v378
        %418 = vmatprep.subr.mxu0 %v377
        %419 = vmatpush1.msra.mxu0 %v376
        %420 = vmatprep.subr.mxu0 %v375
        %421 = vmatpush1.msra.mxu0 %v374
        %422 = vmatprep.subr.mxu0 %v373
        %423 = vmatpush1.msra.mxu0 %v372
        %424 = vmatprep.subr.mxu0 %v371
        %425 = vmatpush1.msra.mxu0 %v370
        %426 = vmatprep.subr.mxu0 %v369
        %427 = vmatpush1.msra.mxu0 %v368
        %428 = vmatprep.subr.mxu0 %v367
        %429 = vmatpush1.msra.mxu0 %v366
        %430 = vmatprep.subr.mxu0 0.0
        %431 = vmatpush2.msra.mxu0 0.0
        %432 = vmatprep.subr.mxu0 0.0
        %433 = vmatpush2.msra.mxu0 0.0
        %434 = vmatprep.subr.mxu0 0.0
        %435 = vmatpush2.msra.mxu0 0.0
        %436 = vmatprep.subr.mxu0 0.0
        %437 = vmatpush2.msra.mxu0 0.0
        %438 = vmatprep.subr.mxu0 0.0
        %439 = vmatpush2.msra.mxu0 0.0
        %440 = vmatprep.subr.mxu0 0.0
        %441 = vmatpush2.msra.mxu0 0.0
        %442 = vmatprep.subr.mxu0 0.0
        %443 = vmatpush2.msra.mxu0 0.0
        %444 = vmatprep.subr.mxu0 0.0
        %445 = vmatpush2.msra.mxu0 0.0
        %446 = vmatprep.subr.mxu0 0.0
        %447 = vmatpush2.msra.mxu0 0.0
        %448 = vmatprep.subr.mxu0 0.0
        %449 = vmatpush2.msra.mxu0 0.0
        %450 = vmatprep.subr.mxu0 0.0
        %451 = vmatpush2.msra.mxu0 0.0
        %452 = vmatprep.subr.mxu0 0.0
        %453 = vmatpush2.msra.mxu0 0.0
        %454 = vmatprep.subr.mxu0 0.0
        %455 = vmatpush2.msra.mxu0 0.0
        %456 = vmatprep.subr.mxu0 0.0
        %457 = vmatpush2.msra.mxu0 0.0
        %458 = vmatprep.subr.mxu0 0.0
        %459 = vmatpush2.msra.mxu0 0.0
        %460 = vmatprep.subr.mxu0 0.0
        %461 = vmatpush2.msra.mxu0 0.0
        %462 = vmatprep.mubr.f32.mxu0 0.0
        %463 = vmatmul.mubr.f32.gmra.mxu0 %v365
        %v464 = vpop.f32.mrf.mxu0
        %v465 = vadd.f32 0.0, %v464
        %v466 = vpop.f32.mrf.mxu0
        %v467 = vadd.f32 0.0, %v466
        %468 = vdwg.mxu0
        %v469 = vxor.u32 %v465, 2147483648
        %v470 = vmul.f32 %v469, 1.442695
        %v471 = vpow.pop %v470
        %v472 = vadd.f32 %v471, 1.0
        %v473 = vrcp.pop %v472
        %v474 = vmul.f32 1.0, %v473
        %v475 = vmul.f32 %v465, %v474
        %v476 = vmul.f32 %v475, %v467
        %v477 = vld [vmem:[#allocation3] sm:$0xff]
        %v478 = vld [vmem:[%s292] sm:$0xff]
        %v479 = vld [vmem:[%s292 + $0x8] sm:$0xff]
        %v480 = vld [vmem:[%s292 + $0x10] sm:$0xff]
        %v481 = vld [vmem:[%s292 + $0x18] sm:$0xff]
        %v482 = vld [vmem:[%s292 + $0x20] sm:$0xff]
        %v483 = vld [vmem:[%s292 + $0x28] sm:$0xff]
        %v484 = vld [vmem:[%s292 + $0x30] sm:$0xff]
        %v485 = vld [vmem:[%s292 + $0x38] sm:$0xff]
        %v486 = vld [vmem:[%s292 + $0x40] sm:$0xff]
        %v487 = vld [vmem:[%s292 + $0x48] sm:$0xff]
        %v488 = vld [vmem:[%s292 + $0x50] sm:$0xff]
        %v489 = vld [vmem:[%s292 + $0x58] sm:$0xff]
        %v490 = vld [vmem:[%s292 + $0x60] sm:$0xff]
        %v491 = vld [vmem:[%s292 + $0x68] sm:$0xff]
        %v492 = vld [vmem:[%s292 + $0x70] sm:$0xff]
        %v493 = vld [vmem:[%s292 + $0x78] sm:$0xff]
        %494 = vmatprep.subr.mxu0 0.0
        %495 = vmatpush1.msra.mxu0 %v493
        %496 = vmatprep.subr.mxu0 0.0
        %497 = vmatpush1.msra.mxu0 %v492
        %498 = vmatprep.subr.mxu0 0.0
        %499 = vmatpush1.msra.mxu0 %v491
        %500 = vmatprep.subr.mxu0 0.0
        %501 = vmatpush1.msra.mxu0 %v490
        %502 = vmatprep.subr.mxu0 0.0
        %503 = vmatpush1.msra.mxu0 %v489
        %504 = vmatprep.subr.mxu0 0.0
        %505 = vmatpush1.msra.mxu0 %v488
        %506 = vmatprep.subr.mxu0 0.0
        %507 = vmatpush1.msra.mxu0 %v487
        %508 = vmatprep.subr.mxu0 0.0
        %509 = vmatpush1.msra.mxu0 %v486
        %510 = vmatprep.subr.mxu0 0.0
        %511 = vmatpush1.msra.mxu0 %v485
        %512 = vmatprep.subr.mxu0 0.0
        %513 = vmatpush1.msra.mxu0 %v484
        %514 = vmatprep.subr.mxu0 0.0
        %515 = vmatpush1.msra.mxu0 %v483
        %516 = vmatprep.subr.mxu0 0.0
        %517 = vmatpush1.msra.mxu0 %v482
        %518 = vmatprep.subr.mxu0 0.0
        %519 = vmatpush1.msra.mxu0 %v481
        %520 = vmatprep.subr.mxu0 0.0
        %521 = vmatpush1.msra.mxu0 %v480
        %522 = vmatprep.subr.mxu0 0.0
        %523 = vmatpush1.msra.mxu0 %v479
        %524 = vmatprep.subr.mxu0 0.0
        %525 = vmatpush1.msra.mxu0 %v478
        %526 = vmatprep.subr.mxu0 0.0
        %527 = vmatpush2.msra.mxu0 0.0
        %528 = vmatprep.subr.mxu0 0.0
        %529 = vmatpush2.msra.mxu0 0.0
        %530 = vmatprep.subr.mxu0 0.0
        %531 = vmatpush2.msra.mxu0 0.0
        %532 = vmatprep.subr.mxu0 0.0
        %533 = vmatpush2.msra.mxu0 0.0
        %534 = vmatprep.subr.mxu0 0.0
        %535 = vmatpush2.msra.mxu0 0.0
        %536 = vmatprep.subr.mxu0 0.0
        %537 = vmatpush2.msra.mxu0 0.0
        %538 = vmatprep.subr.mxu0 0.0
        %539 = vmatpush2.msra.mxu0 0.0
        %540 = vmatprep.subr.mxu0 0.0
        %541 = vmatpush2.msra.mxu0 0.0
        %542 = vmatprep.subr.mxu0 0.0
        %543 = vmatpush2.msra.mxu0 0.0
        %544 = vmatprep.subr.mxu0 0.0
        %545 = vmatpush2.msra.mxu0 0.0
        %546 = vmatprep.subr.mxu0 0.0
        %547 = vmatpush2.msra.mxu0 0.0
        %548 = vmatprep.subr.mxu0 0.0
        %549 = vmatpush2.msra.mxu0 0.0
        %550 = vmatprep.subr.mxu0 0.0
        %551 = vmatpush2.msra.mxu0 0.0
        %552 = vmatprep.subr.mxu0 0.0
        %553 = vmatpush2.msra.mxu0 0.0
        %554 = vmatprep.subr.mxu0 0.0
        %555 = vmatpush2.msra.mxu0 0.0
        %556 = vmatprep.subr.mxu0 0.0
        %557 = vmatpush2.msra.mxu0 0.0
        %558 = vmatprep.mubr.f32.mxu0 0.0
        %559 = vmatmul.mubr.f32.gmra.mxu0 %v476
        %v560 = vpop.f32.mrf.mxu0
        %v561 = vadd.f32 0.0, %v560
        %v562 = vpop.f32.mrf.mxu0
        %563 = vdwg.mxu0
        %v564 = vadd.f32 %v477, %v561
        %565 = vst [vmem:[#allocation3] sm:$0xff] %v564
        %p566 = scmp.eq.s32.totalorder %s30, 1
        // Predicated region
        $region57: #{tpu_custom_call.1} parent=39 // pred_check
          %p567 = pneg %p566
        $region58: #{tpu_custom_call.1} parent=39 // pred_check_branch
          %569 = sbr.rel (%p567) target = $region60
        $region59: #{tpu_custom_call.1} parent=39 // pred_region
          %v570 = vld [vmem:[#allocation3] sm:$0xff]
          %571 = vst [vmem:[%s328] sm:$0xff] %v570
        $region60: #{tpu_custom_call.1} parent=39 // pred_fallthru
          _
        %s572 = sand.u32 %s165, 1
        %s573 = scalar_lea.sflag [#allocation6], %s572
        %s574 = sand.u32 %s165, 1
        %s575 = smul.addr %s574, 8
        %s576 = scalar_lea.vmem [#allocation10], %s575
        // Predicated region
        $region61: #{tpu_custom_call.1} parent=39 // pred_check
          %p577 = pneg %p175
        $region62: #{tpu_custom_call.1} parent=39 // pred_check_branch
          %579 = sbr.rel (%p577) target = $region64
        $region63: #{tpu_custom_call.1} parent=39 // pred_region
          %s581 = ssub.s32 128, 128
          %582 = vsyncadd %s573, %s581
          %s583 = smul.addr %s29, 128
          %s584 = scalar_lea.hbm %s5, %s583
          %s586 = sshll.u32 %s576, 4
          %s587 = int_to_ptr.vmem [resolvable:$true] %s586
          %589 = dma.vmem_to_hbm [thread:$0]  %s587, 128, %s584, %s573
        $region64: #{tpu_custom_call.1} parent=39 // pred_fallthru
          _
      $region40: #{tpu_custom_call.1} parent=5 // pred_fallthru
        _
      %p590 = scmp.le.s32.totalorder 2, %s20
      // Predicated region
      $region65: #{tpu_custom_call.1} parent=5 // pred_check
        %p591 = pneg %p590
      $region66: #{tpu_custom_call.1} parent=5 // pred_check_branch
        %593 = sbr.rel (%p591) target = $region68
      $region67: #{tpu_custom_call.1} parent=5 // pred_region
        %s594 = ssub.s32 %s20, 2
        // Predicated region
        $region69: #{tpu_custom_call.1} parent=67 // pred_check
          %p595 = pneg %p181
        $region70: #{tpu_custom_call.1} parent=67 // pred_check_branch
          %597 = sbr.rel (%p595) target = $region72
        $region71: #{tpu_custom_call.1} parent=67 // pred_region
          %s598 = sand.u32 %s166, 1
          %s599 = scalar_lea.sflag [#allocation6], %s598
          %s600 = sand.u32 %s166, 1
          %s601 = smul.addr %s600, 8
          %s602 = scalar_lea.vmem [#allocation10], %s601
          %603 = dma.done %s599, 128
        $region72: #{tpu_custom_call.1} parent=67 // pred_fallthru
          _
      $region68: #{tpu_custom_call.1} parent=5 // pred_fallthru
        _
    $region6: #{tpu_custom_call.1} parent=1 // loop_footer
      %s24 = sadd.s32 1, %s20
    $region7: #{tpu_custom_call.1} parent=1 // loop_footer_branch
      %19 = sbr.rel target = $region3
    $region8: #{tpu_custom_call.1} parent=1 // loop_exit
      _
    %604 = vsyncpa [#allocation5], 1
    %s605 = scalar_lea.sflag [#allocation5], 1
    %606 = vsyncpa %s605, 1
    %607 = vsyncpa [#allocation8], 1
    %s608 = scalar_lea.sflag [#allocation8], 1
    %609 = vsyncpa %s608, 1
    %610 = vsyncpa [#allocation6], 1
    %s611 = scalar_lea.sflag [#allocation6], 1
    %612 = vsyncpa %s611, 1

</llo_original>
